<compile_context>
chip_gen: v5e
topology: v5e:2x2
jax: 0.10.0
libtpu: 0.0.40
codegen_flags: <defaults>
</compile_context>

<pallas_src>
import jax
import jax.numpy as jnp
from jax.experimental import pallas as pl
from jax.experimental.pallas import tpu as pltpu

_LANES = 128
# 4096 rows x 128 lanes x 4 B = 2 MiB per f32 block.  Multiple of 32, so the
# block also respects packed sublane tiles for bf16 (16) and int8/fp8 (32).
_BLOCK_ROWS = 4096


def _param_copy_kernel(w_ref, o_ref):
    # Lane/sublane-dense identity copy: full-width vector loads and unmasked
    # full-width stores (last block of an uneven grid is masked by Pallas).
    o_ref[...] = w_ref[...]


def my_2d_parameter_forward(weights: jax.Array) -> jax.Array:
    """Pallas equivalent of My_2D_Parameter.forward(): return the parameter."""
    size_in = weights.shape[0]
    rows = pl.cdiv(size_in, _LANES)
    padded = rows * _LANES

    if padded != size_in:
        # Only for non-multiple-of-128 sizes (one extra XLA pass each way).
        w = jnp.pad(weights, (0, padded - size_in))
    else:
        w = weights
    w2d = w.reshape(rows, _LANES)

    # Large block for bandwidth; cdiv grid handles any row count (the partial
    # last block is masked), so there is never a tiny-block fallback.
    block_rows = min(_BLOCK_ROWS, rows)
    grid = (pl.cdiv(rows, block_rows),)
    itemsize = jnp.dtype(weights.dtype).itemsize

    out2d = pl.pallas_call(
        _param_copy_kernel,
        out_shape=jax.ShapeDtypeStruct((rows, _LANES), weights.dtype),
        grid=grid,
        in_specs=[pl.BlockSpec((block_rows, _LANES), lambda i: (i, 0))],
        out_specs=pl.BlockSpec((block_rows, _LANES), lambda i: (i, 0)),
        compiler_params=pltpu.CompilerParams(
            dimension_semantics=("parallel",)),
        cost_estimate=pl.CostEstimate(
            flops=0, transcendentals=0, bytes_accessed=2 * padded * itemsize),
    )(w2d)

    out = out2d.reshape(padded)
    if padded != size_in:
        out = out[:size_in]
    return out


class My2DParameterPallas:
    """Thin wrapper mirroring the PyTorch module's structure."""

    def __init__(self, size_in: int):
        self.size_in = size_in
        # torch.nn.init.zeros_(self.weights) -> deterministic zeros, f32.
        self.weights = jnp.zeros((size_in,), dtype=jnp.float32)

    def __call__(self) -> jax.Array:
        return my_2d_parameter_forward(self.weights)


if __name__ == "__main__":
    key = jax.random.PRNGKey(0)

    # Module semantics: zero-initialized parameter, forward() returns it.
    size_in = 32
    module = My2DParameterPallas(size_in)
    out = jax.block_until_ready(module())
    ref = jnp.zeros((size_in,), dtype=jnp.float32)
    assert out.shape == (size_in,)
    assert out.dtype == jnp.float32
    assert bool(jnp.all(out == ref))

    # Identity semantics on non-trivial values, non-multiple-of-128 length
    # (exercises the pad + masked-last-block path).
    w_unaligned = jax.random.normal(key, (300,), dtype=jnp.float32)
    out_u = jax.block_until_ready(my_2d_parameter_forward(w_unaligned))
    assert out_u.shape == w_unaligned.shape and out_u.dtype == w_unaligned.dtype
    assert bool(jnp.all(out_u == w_unaligned))

    # Aligned length (no pad / no slice, pure kernel copy).
    w_aligned = jax.random.normal(key, (2048,), dtype=jnp.float32)
    out_a = jax.block_until_ready(my_2d_parameter_forward(w_aligned))
    assert out_a.shape == w_aligned.shape and out_a.dtype == w_aligned.dtype
    assert bool(jnp.all(out_a == w_aligned))

    print("KERNEL_OK")
</pallas_src>

<mosaic_0001>
module attributes {stable_mosaic.version = 11 : i64} {
  func.func @_param_copy_kernel(%arg0: i32, %arg1: memref<1x128xf32, #tpu.memory_space<vmem>>, %arg2: memref<1x128xf32, #tpu.memory_space<vmem>>) attributes {dimension_semantics = [#tpu.dimension_semantics<parallel>], iteration_bounds = array<i64: 1>, scalar_prefetch = 0 : i64, scratch_operands = 0 : i64, tpu.core_type = #tpu.core_type<tc>, window_params = [{transform_indices = @transform_0, window_bounds = array<i64: 1, 128>}, {transform_indices = @transform_1, window_bounds = array<i64: 1, 128>}]} {
    %c0 = arith.constant 0 : index
    %c0_0 = arith.constant 0 : index
    %0 = vector.load %arg1[%c0, %c0_0] : memref<1x128xf32, #tpu.memory_space<vmem>>, vector<1x128xf32>
    %c0_1 = arith.constant 0 : index
    %c0_2 = arith.constant 0 : index
    %1 = vector.load %arg2[%c0_1, %c0_2] : memref<1x128xf32, #tpu.memory_space<vmem>>, vector<1x128xf32>
    tpu.vector_store %arg2[%c0_1, %c0_2], %0 {strides = array<i32>} : memref<1x128xf32, #tpu.memory_space<vmem>>, vector<1x128xf32>,
    return
  }
  func.func @transform_0(%arg0: i32) -> (i32, i32) {
    %c0_i32 = arith.constant 0 : i32
    %c0_i32_0 = arith.constant 0 : i32
    return %arg0, %c0_i32 : i32, i32
  }
  func.func @transform_1(%arg0: i32) -> (i32, i32) {
    %c0_i32 = arith.constant 0 : i32
    %c0_i32_0 = arith.constant 0 : i32
    return %arg0, %c0_i32 : i32, i32
  }
}

</mosaic_0001>

<llo_original>
// kernel: tpu_custom_call.1
$region0: #{tpu_custom_call.1}
  #allocation0 [shape = 'u32[]', space=smem, size = 0x4, offset = 0x4, fixed_abs, tag = 'smem constant byte address 0x4 - core index']
  #allocation1 [shape = 'u32[72,128]{1,0:T(1,128)}', space=vmem, size = 0x9000, scoped, tag = 'internal scratch']
  %s0 = inlined_call_operand.hbm [shape: f32[1,128], index: 0, kind: input, shape index: {}]
  %s1 = inlined_call_operand.hbm [shape: f32[1,128], index: 1, kind: output, shape index: {}]
  %s2 = sld [smem:[#allocation0]]
  $region18: #{tpu_custom_call.1} parent=0
    _
  %s4 = ssub.s32 1, %s2
  %s5 = scalar_select 0, %s4, %s2
  $region1: #{tpu_custom_call.1} parent=0
    #allocation2 [shape = 'u8[512]{0}', space=vmem, size = 0x400, scoped, tag = 'input window, operand 0, single buffered']
    #allocation3 [shape = 's32[1]{0}', space=sflag, size = 0x4, scoped, tag = 'scoped memory for tpu_custom_call.1']
    #allocation4 [shape = 's32[1]{0}', space=sflag, size = 0x4, scoped, tag = 'scoped memory for tpu_custom_call.1']
    #allocation5 [shape = 'u8[512]{0}', space=vmem, size = 0x400, scoped, tag = 'output window, operand 0, single buffered']
    %6 = vsyncpa [#allocation3], 0
    %7 = vsyncpa [#allocation4], 0
    // Predicated region
    $region2: #{tpu_custom_call.1} parent=1 // pred_check
      _
    $region3: #{tpu_custom_call.1} parent=1 // pred_check_branch
      %9 = sbr.rel (0) target = $region5
    $region4: #{tpu_custom_call.1} parent=1 // pred_region
      %11 = vsyncadd [#allocation3], 0
      %s13 = sshll.u32 %s0, 4
      %s14 = int_to_ptr.hbm [resolvable:$true] %s13
      %s15 = sshll.u32 [#allocation2], 4
      %s16 = int_to_ptr.vmem [resolvable:$true] %s15
      %18 = dma.hbm_to_vmem [thread:$0]  %s14, 16, %s16, [#allocation3]
    $region5: #{tpu_custom_call.1} parent=1 // pred_fallthru
      _
    // Predicated region
    $region6: #{tpu_custom_call.1} parent=1 // pred_check
      _
    $region7: #{tpu_custom_call.1} parent=1 // pred_check_branch
      %20 = sbr.rel (0) target = $region9
    $region8: #{tpu_custom_call.1} parent=1 // pred_region
      %22 = dma.done [#allocation3], 16
    $region9: #{tpu_custom_call.1} parent=1 // pred_fallthru
      _
    %v23 = vld [vmem:[#allocation2] sm:$0x1]
    %24 = vst [vmem:[#allocation5] sm:$0x1] %v23
    // Predicated region
    $region10: #{tpu_custom_call.1} parent=1 // pred_check
      _
    $region11: #{tpu_custom_call.1} parent=1 // pred_check_branch
      %26 = sbr.rel (0) target = $region13
    $region12: #{tpu_custom_call.1} parent=1 // pred_region
      %28 = vsyncadd [#allocation4], 0
      %s30 = sshll.u32 [#allocation5], 4
      %s31 = int_to_ptr.vmem [resolvable:$true] %s30
      %s32 = sshll.u32 %s1, 4
      %s33 = int_to_ptr.hbm [resolvable:$true] %s32
      %35 = dma.vmem_to_hbm [thread:$0]  %s31, 16, %s33, [#allocation4]
    $region13: #{tpu_custom_call.1} parent=1 // pred_fallthru
      _
    // Predicated region
    $region14: #{tpu_custom_call.1} parent=1 // pred_check
      _
    $region15: #{tpu_custom_call.1} parent=1 // pred_check_branch
      %37 = sbr.rel (0) target = $region17
    $region16: #{tpu_custom_call.1} parent=1 // pred_region
      %39 = dma.done [#allocation4], 16
    $region17: #{tpu_custom_call.1} parent=1 // pred_fallthru
      _
    %40 = vsyncpa [#allocation3], 1
    %41 = vsyncpa [#allocation4], 1

</llo_original>
